<compile_context>
chip_gen: v7x
topology: tpu7x:2x2x1
jax: 0.10.0
libtpu: 0.0.40
codegen_flags: <defaults>
</compile_context>

<pallas_src>
import functools
import math

import jax
import jax.numpy as jnp
from jax.experimental import pallas as pl
from jax.experimental.pallas import tpu as pltpu


def make_positional_encoding_table(d_model: int, max_len: int = 5000) -> jnp.ndarray:
    """Builds the (max_len, 1, d_model) float32 table exactly as the PyTorch __init__."""
    if d_model % 2 != 0:
        raise ValueError(
            "odd d_model is not supported (PyTorch PositionalEncoding errors on the "
            "cos assignment for odd d_model)")
    position = jnp.arange(0, max_len, dtype=jnp.float32)[:, None]            # (max_len, 1)
    div_term = jnp.exp(
        jnp.arange(0, d_model, 2, dtype=jnp.float32) * (-math.log(10000.0) / d_model)
    )                                                                         # (d_model/2,)
    angles = position * div_term                                              # (max_len, d/2)
    pe = jnp.zeros((max_len, d_model), dtype=jnp.float32)
    pe = pe.at[:, 0::2].set(jnp.sin(angles))
    pe = pe.at[:, 1::2].set(jnp.cos(angles))
    # unsqueeze(0).transpose(0, 1) -> (max_len, 1, d_model)
    return pe[:, None, :]


# ---------------------------------------------------------------------------
# tile / VMEM helpers
# ---------------------------------------------------------------------------

def _round_up(x: int, m: int) -> int:
    return ((x + m - 1) // m) * m


def _tpu_generation_info() -> tuple[int, int]:
    """Returns (scoped_vmem_limit_bytes, num_tensorcores_per_chip)."""
    vmem_cap = 128 * 1024 * 1024
    try:
        info = pltpu.get_tpu_info()
        vmem_cap = int(getattr(info, "vmem_capacity_bytes", vmem_cap))
    except Exception:
        pass
    # v7x: 64 MiB VMEM per TC and 2 TensorCores per chip; v5e/v6e: 128 MiB, 1 TC.
    num_tc = 2 if vmem_cap <= 64 * 1024 * 1024 else 1
    # Raise the scoped limit above the default (16/32 MiB) but keep headroom
    # for Mosaic internal scratch: half of physical, capped at 64 MiB.
    vmem_limit = min(vmem_cap // 2, 64 * 1024 * 1024)
    return vmem_limit, num_tc


def _choose_seq_tile(S: int, x_row_bytes: int, out_row_bytes: int, pe_row_bytes: int,
                     vmem_limit: int, num_tc: int) -> int:
    """Largest sequence tile (multiple of 8, or full S) under an honest
    double-buffered VMEM budget, sized so the x slab is ~8 MiB."""
    if S <= 8:
        return S
    # Honest per-row VMEM at double-buffering: x-in tile + out tile + pe tile.
    per_row = 2 * (x_row_bytes + out_row_bytes + pe_row_bytes)
    vmem_rows = max(8, ((vmem_limit // 2) // max(per_row, 1)) // 8 * 8)
    # ~8 MiB x tiles already saturate HBM on every generation (incl. v5e);
    # larger tiles only add pipeline fill/drain latency.
    bytes_rows = max(8, ((8 * 1024 * 1024) // max(x_row_bytes, 1)) // 8 * 8)
    # Don't shrink below ~512 rows (or full S) just to manufacture grid steps:
    # per-step overhead (~0.35us) dominates small tiles and 2-4 steps is plenty
    # of DMA/compute overlap.  The VMEM cap always wins.
    tile = min(vmem_rows, max(bytes_rows, min(512, _round_up(S, 8))))
    if tile >= S:
        tile = S
    # v7x: the "parallel" grid axis is sharded across 2 TensorCores -> force an
    # even grid of >= 2 steps so neither TC idles.  v5e/v6e: don't split.
    if num_tc >= 2 and S > 8:
        steps = pl.cdiv(S, tile) if tile < S else 1
        if steps % 2 == 1:
            steps += 1
        tile = min(tile, _round_up(pl.cdiv(S, steps), 8))
    if tile >= S:
        return S
    return max(8, (tile // 8) * 8)


# ---------------------------------------------------------------------------
# kernel
# ---------------------------------------------------------------------------

def _add_pe_kernel(x_ref, pe_ref, o_ref, *, batch: int, d_model: int):
    # x_ref/o_ref: (seq_tile, B*D) lane-dense tiles; pe_ref: (seq_tile, D) in
    # pe's native dtype (f32).  The batch broadcast is done with static lane
    # slices -- no (seq_tile, B*D) temporary is ever materialized.
    pe_row = pe_ref[...]
    for b in range(batch):
        sl = slice(b * d_model, (b + 1) * d_model)
        o_ref[:, sl] = (x_ref[:, sl] + pe_row).astype(o_ref.dtype)


def positional_encoding_forward(x: jnp.ndarray, pe: jnp.ndarray, *,
                                seq_tile: int | None = None) -> jnp.ndarray:
    """x: (S, B, D);  pe: (max_len, 1, D).  Returns x + pe[:S] (promoted dtype)."""
    S, B, D = x.shape
    max_len = pe.shape[0]
    if S > max_len:
        raise ValueError(f"sequence length {S} exceeds positional-encoding max_len {max_len}")
    if pe.shape[-1] != D:
        raise ValueError(f"d_model mismatch: x has {D}, pe has {pe.shape[-1]}")

    # pe[:S] squeezed to 2-D; kept in its native dtype (cast happens in-kernel,
    # hidden under the DMA -> no extra wrapper-side XLA pass).
    pe2 = pe.reshape(max_len, D)[:S]                # (S, D)
    x2 = x.reshape(S, B * D)                        # contiguous reshape -> free
    out_dtype = jnp.promote_types(x.dtype, pe2.dtype)   # matches torch promotion

    vmem_limit, num_tc = _tpu_generation_info()
    x_row_bytes = B * D * x.dtype.itemsize
    out_row_bytes = B * D * jnp.dtype(out_dtype).itemsize
    pe_row_bytes = D * pe2.dtype.itemsize

    if seq_tile is None:
        seq_tile = _choose_seq_tile(S, x_row_bytes, out_row_bytes, pe_row_bytes,
                                    vmem_limit, num_tc)
    else:
        seq_tile = max(1, min(int(seq_tile), S))
        if seq_tile < S:
            # second-to-minor block dim must be a multiple of 8 (or the full extent)
            seq_tile = max(8, (seq_tile // 8) * 8)

    grid = (pl.cdiv(S, seq_tile),)
    bytes_accessed = S * (x_row_bytes + out_row_bytes + pe_row_bytes)

    out2 = pl.pallas_call(
        functools.partial(_add_pe_kernel, batch=B, d_model=D),
        out_shape=jax.ShapeDtypeStruct((S, B * D), out_dtype),
        grid_spec=pltpu.PrefetchScalarGridSpec(
            num_scalar_prefetch=0,
            grid=grid,
            in_specs=[
                pl.BlockSpec((seq_tile, B * D), lambda i: (i, 0)),   # x tile
                pl.BlockSpec((seq_tile, D), lambda i: (i, 0)),       # pe tile
            ],
            out_specs=pl.BlockSpec((seq_tile, B * D), lambda i: (i, 0)),
        ),
        compiler_params=pltpu.CompilerParams(
            dimension_semantics=("parallel",),
            vmem_limit_bytes=vmem_limit,
        ),
        cost_estimate=pl.CostEstimate(
            flops=S * B * D,
            transcendentals=0,
            bytes_accessed=bytes_accessed,
        ),
    )(x2, pe2)

    return out2.reshape(S, B, D)


if __name__ == "__main__":
    # --- small test matching the module's expected layout -------------------
    d_model = 32
    max_len = 64          # module default is 5000; small synthetic table here
    seq_len = 8
    batch = 2

    key = jax.random.PRNGKey(0)
    x = jax.random.normal(key, (seq_len, batch, d_model), dtype=jnp.float32)
    pe = make_positional_encoding_table(d_model, max_len)

    out = jax.block_until_ready(positional_encoding_forward(x, pe))
    ref = x + pe[:seq_len]
    assert out.shape == (seq_len, batch, d_model)
    assert out.dtype == ref.dtype
    assert jnp.allclose(out, ref, atol=1e-6, rtol=1e-6)

    # --- medium, ragged shape: forces a multi-step pipelined grid with a
    # masked tail block (S not a multiple of the tile) ------------------------
    S2, B2, D2 = 380, 4, 128
    xb = jax.random.normal(jax.random.PRNGKey(0), (S2, B2, D2), dtype=jnp.float32)
    peb = make_positional_encoding_table(D2, 512)
    outb = jax.block_until_ready(positional_encoding_forward(xb, peb, seq_tile=128))
    refb = xb + peb[:S2]
    assert outb.shape == (S2, B2, D2)
    assert jnp.allclose(outb, refb, atol=1e-6, rtol=1e-6)

    # --- auto tile choice + bf16 input (dtype promotion to f32, like torch) --
    xc = jax.random.normal(jax.random.PRNGKey(0), (S2, B2, D2), dtype=jnp.bfloat16)
    outc = jax.block_until_ready(positional_encoding_forward(xc, peb))
    refc = xc + peb[:S2]                      # promotes to float32
    assert outc.dtype == refc.dtype
    assert jnp.allclose(outc, refc, atol=1e-6, rtol=1e-6)

    print("KERNEL_OK")
</pallas_src>

<mosaic_0001>
module attributes {stable_mosaic.version = 11 : i64} {
  func.func @_add_pe_kernel(%arg0: i32, %arg1: memref<8x64xf32, #tpu.memory_space<vmem>>, %arg2: memref<8x32xf32, #tpu.memory_space<vmem>>, %arg3: memref<8x64xf32, #tpu.memory_space<vmem>>) attributes {dimension_semantics = [#tpu.dimension_semantics<parallel>], iteration_bounds = array<i64: 1>, scalar_prefetch = 0 : i64, scratch_operands = 0 : i64, tpu.core_type = #tpu.core_type<tc>, window_params = [{transform_indices = @transform_0, window_bounds = array<i64: 8, 64>}, {transform_indices = @transform_1, window_bounds = array<i64: 8, 32>}, {transform_indices = @transform_2, window_bounds = array<i64: 8, 64>}]} {
    %c0 = arith.constant 0 : index
    %c0_0 = arith.constant 0 : index
    %0 = vector.load %arg2[%c0, %c0_0] : memref<8x32xf32, #tpu.memory_space<vmem>>, vector<8x32xf32>
    %c0_1 = arith.constant 0 : index
    %c0_2 = arith.constant 0 : index
    %1 = vector.load %arg1[%c0_1, %c0_2] : memref<8x64xf32, #tpu.memory_space<vmem>>, vector<8x32xf32>
    %2 = arith.addf %1, %0 : vector<8x32xf32>
    %c0_3 = arith.constant 0 : index
    %c0_4 = arith.constant 0 : index
    %3 = vector.load %arg3[%c0_3, %c0_4] : memref<8x64xf32, #tpu.memory_space<vmem>>, vector<8x32xf32>
    tpu.vector_store %arg3[%c0_3, %c0_4], %2 {strides = array<i32>} : memref<8x64xf32, #tpu.memory_space<vmem>>, vector<8x32xf32>,
    %c0_5 = arith.constant 0 : index
    %c32 = arith.constant 32 : index
    %4 = vector.load %arg1[%c0_5, %c32] : memref<8x64xf32, #tpu.memory_space<vmem>>, vector<8x32xf32>
    %5 = arith.addf %4, %0 : vector<8x32xf32>
    %c0_6 = arith.constant 0 : index
    %c32_7 = arith.constant 32 : index
    %6 = vector.load %arg3[%c0_6, %c32_7] : memref<8x64xf32, #tpu.memory_space<vmem>>, vector<8x32xf32>
    tpu.vector_store %arg3[%c0_6, %c32_7], %5 {strides = array<i32>} : memref<8x64xf32, #tpu.memory_space<vmem>>, vector<8x32xf32>,
    return
  }
  func.func @transform_0(%arg0: i32) -> (i32, i32) {
    %c0_i32 = arith.constant 0 : i32
    %c0_i32_0 = arith.constant 0 : i32
    return %arg0, %c0_i32 : i32, i32
  }
  func.func @transform_1(%arg0: i32) -> (i32, i32) {
    %c0_i32 = arith.constant 0 : i32
    %c0_i32_0 = arith.constant 0 : i32
    return %arg0, %c0_i32 : i32, i32
  }
  func.func @transform_2(%arg0: i32) -> (i32, i32) {
    %c0_i32 = arith.constant 0 : i32
    %c0_i32_0 = arith.constant 0 : i32
    return %arg0, %c0_i32 : i32, i32
  }
}

</mosaic_0001>

<llo_original>
// kernel: tpu_custom_call.1
$region0: #{tpu_custom_call.1}
  #allocation0 [shape = 'u32[]', space=smem, size = 0x4, offset = 0x4, fixed_abs, tag = 'smem constant byte address 0x4 - core index']
  #allocation1 [shape = 'u32[144,128]{1,0:T(1,128)}', space=vmem, size = 0x12000, scoped, tag = 'internal scratch']
  %s0 = inlined_call_operand.hbm [shape: f32[8,64], index: 0, kind: input, shape index: {}]
  %s1 = inlined_call_operand.hbm [shape: f32[8,32], index: 1, kind: input, shape index: {}]
  %s2 = inlined_call_operand.hbm [shape: f32[8,64], index: 2, kind: output, shape index: {}]
  %s3 = sld [smem:[#allocation0]]
  $region26: #{tpu_custom_call.1} parent=0
    _
  %s5 = ssub.s32 1, %s3
  %s6 = scalar_select 0, %s5, %s3
  $region1: #{tpu_custom_call.1} parent=0
    #allocation2 [shape = 'u8[4096]{0}', space=vmem, size = 0x1000, scoped, tag = 'input window, operand 0, single buffered']
    #allocation3 [shape = 's32[1]{0}', space=sflag, size = 0x4, scoped, tag = 'scoped memory for tpu_custom_call.1']
    #allocation4 [shape = 's32[1]{0}', space=sflag, size = 0x4, scoped, tag = 'scoped memory for tpu_custom_call.1']
    #allocation5 [shape = 'u8[4096]{0}', space=vmem, size = 0x1000, scoped, tag = 'input window, operand 1, single buffered']
    #allocation6 [shape = 's32[1]{0}', space=sflag, size = 0x4, scoped, tag = 'scoped memory for tpu_custom_call.1']
    #allocation7 [shape = 'u8[4096]{0}', space=vmem, size = 0x1000, scoped, tag = 'output window, operand 0, single buffered']
    %7 = vsyncpa [#allocation3], 0
    %8 = vsyncpa [#allocation6], 0
    %9 = vsyncpa [#allocation4], 0
    // Predicated region
    $region2: #{tpu_custom_call.1} parent=1 // pred_check
      _
    $region3: #{tpu_custom_call.1} parent=1 // pred_check_branch
      %11 = sbr.rel (0) target = $region5
    $region4: #{tpu_custom_call.1} parent=1 // pred_region
      %s13 = ssub.s32 128, 128
      %14 = vsyncadd [#allocation3], %s13
      %s16 = sshll.u32 [#allocation2], 4
      %s17 = int_to_ptr.vmem [resolvable:$true] %s16
      %19 = dma.hbm_to_vmem [thread:$0]  %s0, 128, %s17, [#allocation3]
    $region5: #{tpu_custom_call.1} parent=1 // pred_fallthru
      _
    // Predicated region
    $region6: #{tpu_custom_call.1} parent=1 // pred_check
      _
    $region7: #{tpu_custom_call.1} parent=1 // pred_check_branch
      %21 = sbr.rel (0) target = $region9
    $region8: #{tpu_custom_call.1} parent=1 // pred_region
      %s23 = ssub.s32 128, 128
      %24 = vsyncadd [#allocation6], %s23
      %s26 = sshll.u32 [#allocation5], 4
      %s27 = int_to_ptr.vmem [resolvable:$true] %s26
      %29 = dma.hbm_to_vmem [thread:$0]  %s1, 128, %s27, [#allocation6]
    $region9: #{tpu_custom_call.1} parent=1 // pred_fallthru
      _
    // Predicated region
    $region10: #{tpu_custom_call.1} parent=1 // pred_check
      _
    $region11: #{tpu_custom_call.1} parent=1 // pred_check_branch
      %31 = sbr.rel (0) target = $region13
    $region12: #{tpu_custom_call.1} parent=1 // pred_region
      %32 = dma.done [#allocation3], 128
    $region13: #{tpu_custom_call.1} parent=1 // pred_fallthru
      _
    // Predicated region
    $region14: #{tpu_custom_call.1} parent=1 // pred_check
      _
    $region15: #{tpu_custom_call.1} parent=1 // pred_check_branch
      %34 = sbr.rel (0) target = $region17
    $region16: #{tpu_custom_call.1} parent=1 // pred_region
      %35 = dma.done [#allocation6], 128
    $region17: #{tpu_custom_call.1} parent=1 // pred_fallthru
      _
    %v36 = vld [vmem:[#allocation5] sm:$0xff]
    %v37 = vld [vmem:[#allocation2] sm:$0xff]
    %v38 = vadd.f32 %v37, %v36
    %vm39 = vcmask 261120
    %40 = vst.msk [vmem:[#allocation7] sm:$0xff] %vm39, %v38
    %v41 = vld [vmem:[#allocation2] sm:$0xff]
    %43 = vrot.lane.b32.xlu0 %v36, 32
    %v44 = vpop.permute.xlu0 %43
    %v46 = vadd.f32 %v41, %v44
    %vm47 = vcmask 523520
    %48 = vst.msk [vmem:[#allocation7] sm:$0xff] %vm47, %v46
    // Predicated region
    $region18: #{tpu_custom_call.1} parent=1 // pred_check
      _
    $region19: #{tpu_custom_call.1} parent=1 // pred_check_branch
      %50 = sbr.rel (0) target = $region21
    $region20: #{tpu_custom_call.1} parent=1 // pred_region
      %s52 = ssub.s32 128, 128
      %53 = vsyncadd [#allocation4], %s52
      %s55 = sshll.u32 [#allocation7], 4
      %s56 = int_to_ptr.vmem [resolvable:$true] %s55
      %58 = dma.vmem_to_hbm [thread:$0]  %s56, 128, %s2, [#allocation4]
    $region21: #{tpu_custom_call.1} parent=1 // pred_fallthru
      _
    // Predicated region
    $region22: #{tpu_custom_call.1} parent=1 // pred_check
      _
    $region23: #{tpu_custom_call.1} parent=1 // pred_check_branch
      %60 = sbr.rel (0) target = $region25
    $region24: #{tpu_custom_call.1} parent=1 // pred_region
      %61 = dma.done [#allocation4], 128
    $region25: #{tpu_custom_call.1} parent=1 // pred_fallthru
      _
    %62 = vsyncpa [#allocation3], 1
    %63 = vsyncpa [#allocation6], 1
    %64 = vsyncpa [#allocation4], 1

</llo_original>
